<compile_context>
chip_gen: v6e
topology: v6e:2x2x1
jax: 0.10.0
libtpu: 0.0.40
codegen_flags: <defaults>
</compile_context>

<pallas_src>
import functools

import jax
import jax.numpy as jnp
from jax.experimental import pallas as pl
from jax.experimental.pallas import tpu as pltpu

BN_EPS = 1e-5       # nn.BatchNorm1d default
LANE = 128
SUBLANE = 8
STATS_ROWS = 8      # sublane-padded stats block: row 0 = sum, row 1 = sum(y^2)


def _round_up(x, m):
    return (x + m - 1) // m * m


def _elu(x):
    # F.elu, alpha=1.0 (exp only evaluated on the non-positive side)
    return jnp.where(x > 0, x, jnp.exp(jnp.minimum(x, 0.0)) - 1.0)


def _vmem_capacity_bytes():
    try:
        return int(pltpu.get_tpu_info().vmem_capacity_bytes)
    except Exception:
        return 64 << 20   # v7x worst case


# ----------------------------------------------------------------------------
# Pass 1: fc1 -> ELU -> (dropout p=0) -> fc2 -> ELU, streamed y + partial stats
# ----------------------------------------------------------------------------
def _mlp_compute_kernel(nrows_ref, x_ref, w1_ref, b1_ref, w2_ref, b2_ref,
                        y_ref, stats_ref, *, tile_m):
    i = pl.program_id(0)
    nrows = nrows_ref[0]

    x = x_ref[...]                                   # (tm, n_in) bf16
    h = jnp.dot(x, w1_ref[...],
                preferred_element_type=jnp.float32) + b1_ref[...]
    h = _elu(h)
    # TODO(synk): dropout omitted — identity for do_prob=0.0 (module default) /
    # eval mode; a pltpu.prng_random_bits mask would be needed for do_prob>0.
    y = jnp.dot(h.astype(w2_ref.dtype), w2_ref[...],
                preferred_element_type=jnp.float32) + b2_ref[...]
    y = _elu(y)                                      # (tm, n_out) f32

    # Streamed, row-tiled output (pipelined HBM writeback).
    y_ref[...] = y

    n_out = y.shape[1]
    pad_rows = jnp.zeros((STATS_ROWS - 2, n_out), jnp.float32)

    def _write_stats(y_masked):
        s = jnp.sum(y_masked, axis=0, keepdims=True)
        sq = jnp.sum(y_masked * y, axis=0, keepdims=True)
        stats_ref[...] = jnp.concatenate([s, sq, pad_rows], axis=0)[None]

    # Common case: full tile, plain unmasked sums.
    _write_stats(y)

    # Only the final partial tile re-does the sums with the validity mask.
    @pl.when((i + 1) * tile_m > nrows)
    def _():
        row = jax.lax.broadcasted_iota(jnp.int32, (tile_m, 1), 0) + i * tile_m
        _write_stats(jnp.where(row < nrows, y, 0.0))


# ----------------------------------------------------------------------------
# Pass 2: streamed BatchNorm apply (scale/shift precomputed in the wrapper)
# ----------------------------------------------------------------------------
def _bn_apply_kernel(y_ref, scale_ref, shift_ref, o_ref):
    o_ref[...] = y_ref[...] * scale_ref[...] + shift_ref[...]


# ----------------------------------------------------------------------------
# Wrapper
# ----------------------------------------------------------------------------
def mlp_forward(x3d, params, *, tile_m=512):
    """inputs: [B, N, n_in] -> [B, N, n_out]  (matches MLP.forward)."""
    n_in, _, n_out = params["dims"]
    w1p, b1p, w2p, b2p, gamma, beta = params["padded"]
    f_hid = w1p.shape[1]

    B, N = x3d.shape[0], x3d.shape[1]
    m = B * N
    x2d = x3d.reshape(m, n_in)

    tm = min(_round_up(tile_m, SUBLANE), _round_up(m, SUBLANE))
    m_pad = _round_up(m, tm)
    num_tiles = m_pad // tm

    # bf16, narrow (no lane padding) input slab: real bytes only on the wire.
    x_pad = jnp.zeros((m_pad, n_in), jnp.bfloat16).at[:m, :].set(
        x2d.astype(jnp.bfloat16))
    nrows = jnp.array([m], jnp.int32)

    # Generation-aware VMEM budget (review: never exceed v7x's 64 MiB).
    bf16, f32 = 2, 4
    est = 2 * (tm * n_in * bf16                      # x tile (double-buffered)
               + tm * n_out * f32                    # y tile out
               + STATS_ROWS * n_out * f32            # stats tile out
               + n_in * f_hid * bf16 + f_hid * f32   # w1 + b1 (resident)
               + f_hid * n_out * bf16 + n_out * f32) # w2 + b2 (resident)
    cap = _vmem_capacity_bytes()
    vmem_limit = int(max(min(est + (8 << 20), cap - (8 << 20)), 4 << 20))

    # -------- Pass 1: matmuls + ELU, streamed y + per-tile partial BN stats --
    y_pre, stats = pl.pallas_call(
        functools.partial(_mlp_compute_kernel, tile_m=tm),
        out_shape=(jax.ShapeDtypeStruct((m_pad, n_out), jnp.float32),
                   jax.ShapeDtypeStruct((num_tiles, STATS_ROWS, n_out),
                                        jnp.float32)),
        grid_spec=pltpu.PrefetchScalarGridSpec(
            num_scalar_prefetch=1,              # nrows -> SMEM
            grid=(num_tiles,),
            in_specs=[
                pl.BlockSpec((tm, n_in), lambda i, nr: (i, 0)),     # x row tile
                pl.BlockSpec((n_in, f_hid), lambda i, nr: (0, 0)),  # w1 resident
                pl.BlockSpec((1, f_hid), lambda i, nr: (0, 0)),     # b1
                pl.BlockSpec((f_hid, n_out), lambda i, nr: (0, 0)), # w2 resident
                pl.BlockSpec((1, n_out), lambda i, nr: (0, 0)),     # b2
            ],
            out_specs=[
                pl.BlockSpec((tm, n_out), lambda i, nr: (i, 0)),            # y
                pl.BlockSpec((1, STATS_ROWS, n_out), lambda i, nr: (i, 0, 0)),
            ],
        ),
        compiler_params=pltpu.CompilerParams(
            dimension_semantics=("parallel",),   # no cross-tile state -> 2 TCs
            vmem_limit_bytes=vmem_limit,
        ),
    )(nrows, x_pad, w1p, b1p, w2p, b2p)

    # Tiny partial-stat reduction + BN coefficients (training-mode, biased var).
    sum_y = jnp.sum(stats[:, 0:1, :], axis=0)                  # (1, n_out)
    sum_yy = jnp.sum(stats[:, 1:2, :], axis=0)                 # (1, n_out)
    mean = sum_y / m
    var = jnp.maximum(sum_yy / m - mean * mean, 0.0)
    scale = gamma * jax.lax.rsqrt(var + BN_EPS)                # (1, n_out)
    shift = beta - mean * scale                                # (1, n_out)

    # -------- Pass 2: streamed normalize (cheap second sweep) ----------------
    out_pad = pl.pallas_call(
        _bn_apply_kernel,
        out_shape=jax.ShapeDtypeStruct((m_pad, n_out), jnp.float32),
        grid_spec=pltpu.PrefetchScalarGridSpec(
            num_scalar_prefetch=0,
            grid=(num_tiles,),
            in_specs=[
                pl.BlockSpec((tm, n_out), lambda i: (i, 0)),
                pl.BlockSpec((1, n_out), lambda i: (0, 0)),
                pl.BlockSpec((1, n_out), lambda i: (0, 0)),
            ],
            out_specs=pl.BlockSpec((tm, n_out), lambda i: (i, 0)),
        ),
        compiler_params=pltpu.CompilerParams(
            dimension_semantics=("parallel",),
            vmem_limit_bytes=vmem_limit,
        ),
    )(y_pre, scale, shift)

    return out_pad[:m].reshape(B, N, n_out)


# ----------------------------------------------------------------------------
# Parameters (deterministic, matches the PyTorch __init__ / init_weights)
# ----------------------------------------------------------------------------
def xavier_normal(key, fan_in, fan_out):
    std = (2.0 / (fan_in + fan_out)) ** 0.5
    # stored as [in, out] so the kernel computes x @ W
    return std * jax.random.normal(key, (fan_in, fan_out), jnp.float32)


def init_mlp_params(key, n_in, n_hid, n_out, compute_dtype=jnp.bfloat16):
    """Torch-equivalent init. 'raw' (f32, unpadded) feeds the reference;
    'padded' (bf16 weights, hidden dim lane-padded only) feeds the kernel."""
    k1, k2 = jax.random.split(key)
    w1 = xavier_normal(k1, n_in, n_hid)
    b1 = jnp.full((1, n_hid), 0.1, jnp.float32)
    w2 = xavier_normal(k2, n_hid, n_out)
    b2 = jnp.full((1, n_out), 0.1, jnp.float32)
    gamma = jnp.ones((1, n_out), jnp.float32)   # bn.weight = 1
    beta = jnp.zeros((1, n_out), jnp.float32)   # bn.bias = 0

    # Only the hidden dim is lane-padded; n_in / n_out stay narrow.
    f_hid = _round_up(n_hid, LANE)
    w1p = jnp.zeros((n_in, f_hid), compute_dtype).at[:, :n_hid].set(
        w1.astype(compute_dtype))
    b1p = jnp.zeros((1, f_hid), jnp.float32).at[:, :n_hid].set(b1)
    w2p = jnp.zeros((f_hid, n_out), compute_dtype).at[:n_hid, :].set(
        w2.astype(compute_dtype))

    return {"raw": (w1, b1, w2, b2, gamma, beta),
            "padded": (w1p, b1p, w2p, b2, gamma, beta),
            "dims": (n_in, n_hid, n_out),
            "compute_dtype": compute_dtype}


# ----------------------------------------------------------------------------
# Pure-JAX reference (same math, matmuls in the same MXU operand dtype)
# ----------------------------------------------------------------------------
def ref_mlp_forward(x3d, params):
    w1, b1, w2, b2, g, bt = params["raw"]
    cd = params["compute_dtype"]
    b, n, _ = x3d.shape
    x = x3d.reshape(b * n, -1)
    h = _elu(jnp.dot(x.astype(cd), w1.astype(cd),
                     preferred_element_type=jnp.float32) + b1)
    y = _elu(jnp.dot(h.astype(cd), w2.astype(cd),
                     preferred_element_type=jnp.float32) + b2)
    mean = y.mean(0, keepdims=True)
    var = ((y - mean) ** 2).mean(0, keepdims=True)     # biased, training mode
    y = (y - mean) * jax.lax.rsqrt(var + BN_EPS) * g + bt
    return y.reshape(b, n, -1)


# ----------------------------------------------------------------------------
if __name__ == "__main__":
    key = jax.random.PRNGKey(0)
    k_in, k_params = jax.random.split(key)

    # NRI-style small shapes: batch=2, objects/edges=20, n_in=32, hid=64, out=32.
    B, N = 2, 20
    n_in, n_hid, n_out = 32, 64, 32

    inputs = jax.random.normal(k_in, (B, N, n_in), jnp.float32)
    params = init_mlp_params(k_params, n_in, n_hid, n_out)

    ref = ref_mlp_forward(inputs, params)

    # Single-tile path (whole row slab handled in one grid step).
    out = jax.block_until_ready(mlp_forward(inputs, params))
    assert out.shape == (B, N, n_out), out.shape
    assert jnp.allclose(out, ref, rtol=1e-3, atol=1e-3), "mismatch (single tile)"

    # Multi-tile path: exercises per-tile partial BN stats, the masked final
    # partial tile, and the streamed second normalize pass.
    out_tiled = jax.block_until_ready(mlp_forward(inputs, params, tile_m=16))
    assert jnp.allclose(out_tiled, ref, rtol=1e-3, atol=1e-3), "mismatch (tiled)"

    print("KERNEL_OK")
</pallas_src>

<mosaic_0001>
module attributes {stable_mosaic.version = 11 : i64} {
  func.func @_mlp_compute_kernel(%arg0: i32, %arg1: memref<1xi32, #tpu.memory_space<smem>>, %arg2: memref<40x32xbf16, #tpu.memory_space<vmem>>, %arg3: memref<32x128xbf16, #tpu.memory_space<vmem>>, %arg4: memref<1x128xf32, #tpu.memory_space<vmem>>, %arg5: memref<128x32xbf16, #tpu.memory_space<vmem>>, %arg6: memref<1x32xf32, #tpu.memory_space<vmem>>, %arg7: memref<40x32xf32, #tpu.memory_space<vmem>>, %arg8: memref<1x8x32xf32, #tpu.memory_space<vmem>>) attributes {dimension_semantics = [#tpu.dimension_semantics<parallel>], iteration_bounds = array<i64: 1>, scalar_prefetch = 1 : i64, scratch_operands = 0 : i64, tpu.core_type = #tpu.core_type<tc>, window_params = [{transform_indices = @transform_0, window_bounds = array<i64: 40, 32>}, {pipeline_mode = #tpu.pipeline_mode<synchronous>, transform_indices = @transform_1, window_bounds = array<i64: 32, 128>}, {pipeline_mode = #tpu.pipeline_mode<synchronous>, transform_indices = @transform_2, window_bounds = array<i64: 1, 128>}, {pipeline_mode = #tpu.pipeline_mode<synchronous>, transform_indices = @transform_3, window_bounds = array<i64: 128, 32>}, {pipeline_mode = #tpu.pipeline_mode<synchronous>, transform_indices = @transform_4, window_bounds = array<i64: 1, 32>}, {transform_indices = @transform_5, window_bounds = array<i64: 40, 32>}, {transform_indices = @transform_6, window_bounds = array<i64: 1, 8, 32>}]} {
    %c0 = arith.constant 0 : index
    %0 = memref.load %arg1[%c0] : memref<1xi32, #tpu.memory_space<smem>>
    %c0_0 = arith.constant 0 : index
    %c0_1 = arith.constant 0 : index
    %1 = vector.load %arg2[%c0_0, %c0_1] : memref<40x32xbf16, #tpu.memory_space<vmem>>, vector<40x32xbf16>
    %c0_2 = arith.constant 0 : index
    %c0_3 = arith.constant 0 : index
    %2 = vector.load %arg3[%c0_2, %c0_3] : memref<32x128xbf16, #tpu.memory_space<vmem>>, vector<32x128xbf16>
    %cst = arith.constant dense<0.000000e+00> : vector<40x128xf32>
    %3 = tpu.matmul %1, %2, %cst {dimension_numbers = #tpu.dot_dimension_numbers<[1], [0], [0], [1], [0, 0, 1, 1], [], []>} : vector<40x32xbf16>, vector<32x128xbf16>, vector<40x128xf32> -> vector<40x128xf32>
    %c0_4 = arith.constant 0 : index
    %c0_5 = arith.constant 0 : index
    %4 = vector.load %arg4[%c0_4, %c0_5] : memref<1x128xf32, #tpu.memory_space<vmem>>, vector<1x128xf32>
    %5 = vector.broadcast %4 : vector<1x128xf32> to vector<40x128xf32>
    %6 = arith.addf %3, %5 : vector<40x128xf32>
    %cst_6 = arith.constant 0.000000e+00 : f32
    %7 = vector.broadcast %cst_6 : f32 to vector<40x128xf32>
    %8 = arith.cmpf ogt, %6, %7 : vector<40x128xf32>
    %cst_7 = arith.constant 0.000000e+00 : f32
    %9 = vector.broadcast %cst_7 : f32 to vector<40x128xf32>
    %10 = arith.minimumf %6, %9 : vector<40x128xf32>
    %11 = math.exp %10 : vector<40x128xf32>
    %cst_8 = arith.constant 1.000000e+00 : f32
    %12 = vector.broadcast %cst_8 : f32 to vector<40x128xf32>
    %13 = arith.subf %11, %12 : vector<40x128xf32>
    %14 = arith.select %8, %6, %13 : vector<40x128xi1>, vector<40x128xf32>
    %15 = arith.truncf %14 : vector<40x128xf32> to vector<40x128xbf16>
    %c0_9 = arith.constant 0 : index
    %c0_10 = arith.constant 0 : index
    %16 = vector.load %arg5[%c0_9, %c0_10] : memref<128x32xbf16, #tpu.memory_space<vmem>>, vector<128x32xbf16>
    %cst_11 = arith.constant dense<0.000000e+00> : vector<40x32xf32>
    %17 = tpu.matmul %15, %16, %cst_11 {dimension_numbers = #tpu.dot_dimension_numbers<[1], [0], [0], [1], [0, 0, 1, 1], [], []>} : vector<40x128xbf16>, vector<128x32xbf16>, vector<40x32xf32> -> vector<40x32xf32>
    %c0_12 = arith.constant 0 : index
    %c0_13 = arith.constant 0 : index
    %18 = vector.load %arg6[%c0_12, %c0_13] : memref<1x32xf32, #tpu.memory_space<vmem>>, vector<1x32xf32>
    %19 = vector.broadcast %18 : vector<1x32xf32> to vector<40x32xf32>
    %20 = arith.addf %17, %19 : vector<40x32xf32>
    %cst_14 = arith.constant 0.000000e+00 : f32
    %21 = vector.broadcast %cst_14 : f32 to vector<40x32xf32>
    %22 = arith.cmpf ogt, %20, %21 : vector<40x32xf32>
    %cst_15 = arith.constant 0.000000e+00 : f32
    %23 = vector.broadcast %cst_15 : f32 to vector<40x32xf32>
    %24 = arith.minimumf %20, %23 : vector<40x32xf32>
    %25 = math.exp %24 : vector<40x32xf32>
    %cst_16 = arith.constant 1.000000e+00 : f32
    %26 = vector.broadcast %cst_16 : f32 to vector<40x32xf32>
    %27 = arith.subf %25, %26 : vector<40x32xf32>
    %28 = arith.select %22, %20, %27 : vector<40x32xi1>, vector<40x32xf32>
    %c0_17 = arith.constant 0 : index
    %c0_18 = arith.constant 0 : index
    %29 = vector.load %arg7[%c0_17, %c0_18] : memref<40x32xf32, #tpu.memory_space<vmem>>, vector<40x32xf32>
    tpu.vector_store %arg7[%c0_17, %c0_18], %28 {strides = array<i32>} : memref<40x32xf32, #tpu.memory_space<vmem>>, vector<40x32xf32>,
    %cst_19 = arith.constant 0.000000e+00 : f32
    %30 = vector.broadcast %cst_19 : f32 to vector<6x32xf32>
    %cst_20 = arith.constant dense<0.000000e+00> : vector<32xf32>
    %31 = vector.multi_reduction <add>, %28, %cst_20 [0] : vector<40x32xf32> to vector<32xf32>
    %32 = vector.shape_cast %31 : vector<32xf32> to vector<1x32xf32>
    %33 = arith.mulf %28, %28 : vector<40x32xf32>
    %cst_21 = arith.constant dense<0.000000e+00> : vector<32xf32>
    %34 = vector.multi_reduction <add>, %33, %cst_21 [0] : vector<40x32xf32> to vector<32xf32>
    %35 = vector.shape_cast %34 : vector<32xf32> to vector<1x32xf32>
    %36 = tpu.concatenate %32, %35, %30 in 0 : vector<1x32xf32>, vector<1x32xf32>, vector<6x32xf32> -> vector<8x32xf32>
    %37 = vector.shape_cast %36 : vector<8x32xf32> to vector<1x8x32xf32>
    %c0_22 = arith.constant 0 : index
    %c0_23 = arith.constant 0 : index
    %c0_24 = arith.constant 0 : index
    %38 = vector.load %arg8[%c0_22, %c0_23, %c0_24] : memref<1x8x32xf32, #tpu.memory_space<vmem>>, vector<1x8x32xf32>
    tpu.vector_store %arg8[%c0_22, %c0_23, %c0_24], %37 {strides = array<i32>} : memref<1x8x32xf32, #tpu.memory_space<vmem>>, vector<1x8x32xf32>,
    %c1_i32 = arith.constant 1 : i32
    %39 = arith.addi %arg0, %c1_i32 : i32
    %c40_i32 = arith.constant 40 : i32
    %40 = arith.muli %39, %c40_i32 : i32
    %41 = arith.cmpi sgt, %40, %0 : i32
    %42 = arith.extui %41 : i1 to i32
    %c0_i32 = arith.constant 0 : i32
    %43 = arith.cmpi ne, %42, %c0_i32 : i32
    scf.if %43 {
      %44 = tpu.iota {dimensions = array<i32: 0>} : vector<40x1xi32>
      %c40_i32_25 = arith.constant 40 : i32
      %45 = arith.muli %arg0, %c40_i32_25 : i32
      %46 = vector.broadcast %45 : i32 to vector<40x1xi32>
      %47 = arith.addi %44, %46 : vector<40x1xi32>
      %48 = vector.broadcast %0 : i32 to vector<40x1xi32>
      %49 = arith.cmpi slt, %47, %48 : vector<40x1xi32>
      %cst_26 = arith.constant 0.000000e+00 : f32
      %50 = vector.shape_cast %49 : vector<40x1xi1> to vector<40x1xi1>
      %51 = vector.broadcast %50 : vector<40x1xi1> to vector<40x32xi1>
      %52 = vector.broadcast %cst_26 : f32 to vector<40x32xf32>
      %53 = arith.select %51, %28, %52 : vector<40x32xi1>, vector<40x32xf32>
      %cst_27 = arith.constant dense<0.000000e+00> : vector<32xf32>
      %54 = vector.multi_reduction <add>, %53, %cst_27 [0] : vector<40x32xf32> to vector<32xf32>
      %55 = vector.shape_cast %54 : vector<32xf32> to vector<1x32xf32>
      %56 = arith.mulf %53, %28 : vector<40x32xf32>
      %cst_28 = arith.constant dense<0.000000e+00> : vector<32xf32>
      %57 = vector.multi_reduction <add>, %56, %cst_28 [0] : vector<40x32xf32> to vector<32xf32>
      %58 = vector.shape_cast %57 : vector<32xf32> to vector<1x32xf32>
      %59 = tpu.concatenate %55, %58, %30 in 0 : vector<1x32xf32>, vector<1x32xf32>, vector<6x32xf32> -> vector<8x32xf32>
      %60 = vector.shape_cast %59 : vector<8x32xf32> to vector<1x8x32xf32>
      %c0_29 = arith.constant 0 : index
      %c0_30 = arith.constant 0 : index
      %c0_31 = arith.constant 0 : index
      %61 = vector.load %arg8[%c0_29, %c0_30, %c0_31] : memref<1x8x32xf32, #tpu.memory_space<vmem>>, vector<1x8x32xf32>
      tpu.vector_store %arg8[%c0_29, %c0_30, %c0_31], %60 {strides = array<i32>} : memref<1x8x32xf32, #tpu.memory_space<vmem>>, vector<1x8x32xf32>,
    } else {
    }
    return
  }
  func.func @transform_0(%arg0: i32, %arg1: memref<1xi32, #tpu.memory_space<smem>>) -> (i32, i32) {
    %c0_i32 = arith.constant 0 : i32
    %c0_i32_0 = arith.constant 0 : i32
    return %arg0, %c0_i32 : i32, i32
  }
  func.func @transform_1(%arg0: i32, %arg1: memref<1xi32, #tpu.memory_space<smem>>) -> (i32, i32) {
    %c0_i32 = arith.constant 0 : i32
    %c0_i32_0 = arith.constant 0 : i32
    %c0_i32_1 = arith.constant 0 : i32
    return %c0_i32, %c0_i32_0 : i32, i32
  }
  func.func @transform_2(%arg0: i32, %arg1: memref<1xi32, #tpu.memory_space<smem>>) -> (i32, i32) {
    %c0_i32 = arith.constant 0 : i32
    %c0_i32_0 = arith.constant 0 : i32
    %c0_i32_1 = arith.constant 0 : i32
    return %c0_i32, %c0_i32_0 : i32, i32
  }
  func.func @transform_3(%arg0: i32, %arg1: memref<1xi32, #tpu.memory_space<smem>>) -> (i32, i32) {
    %c0_i32 = arith.constant 0 : i32
    %c0_i32_0 = arith.constant 0 : i32
    %c0_i32_1 = arith.constant 0 : i32
    return %c0_i32, %c0_i32_0 : i32, i32
  }
  func.func @transform_4(%arg0: i32, %arg1: memref<1xi32, #tpu.memory_space<smem>>) -> (i32, i32) {
    %c0_i32 = arith.constant 0 : i32
    %c0_i32_0 = arith.constant 0 : i32
    %c0_i32_1 = arith.constant 0 : i32
    return %c0_i32, %c0_i32_0 : i32, i32
  }
  func.func @transform_5(%arg0: i32, %arg1: memref<1xi32, #tpu.memory_space<smem>>) -> (i32, i32) {
    %c0_i32 = arith.constant 0 : i32
    %c0_i32_0 = arith.constant 0 : i32
    return %arg0, %c0_i32 : i32, i32
  }
  func.func @transform_6(%arg0: i32, %arg1: memref<1xi32, #tpu.memory_space<smem>>) -> (i32, i32, i32) {
    %c0_i32 = arith.constant 0 : i32
    %c0_i32_0 = arith.constant 0 : i32
    %c0_i32_1 = arith.constant 0 : i32
    return %arg0, %c0_i32, %c0_i32_0 : i32, i32, i32
  }
}

</mosaic_0001>

<llo_original>
// kernel: tpu_custom_call.1
$region0: #{tpu_custom_call.1}
  #allocation0 [shape = 'u32[]', space=smem, size = 0x4, offset = 0x4, fixed_abs, tag = 'smem constant byte address 0x4 - core index']
  #allocation1 [shape = 'u32[144,128]{1,0:T(1,128)}', space=vmem, size = 0x12000, scoped, tag = 'internal scratch']
  #allocation2 [shape = 's32[1]{0}', space=sflag, size = 0x4, scoped, tag = 'scoped memory for tpu_custom_call.1']
  #allocation3 [shape = 's32[1]{0:T(128)S(6)}', space=smem, size = 0x200, scoped, tag = 'prefetched SMEM operand 0']
  %s0 = inlined_call_operand.<no memory space> [shape: s32[1], index: 0, kind: input, shape index: {}]
  %s1 = inlined_call_operand.vmem [shape: bf16[40,32], index: 1, kind: input, shape index: {}]
  %s2 = inlined_call_operand.vmem [shape: bf16[32,128], index: 2, kind: input, shape index: {}]
  %s3 = inlined_call_operand.vmem [shape: f32[1,128], index: 3, kind: input, shape index: {}]
  %s4 = inlined_call_operand.vmem [shape: bf16[128,32], index: 4, kind: input, shape index: {}]
  %s5 = inlined_call_operand.vmem [shape: f32[1,32], index: 5, kind: input, shape index: {}]
  %s6 = inlined_call_operand.vmem [shape: f32[40,32], index: 6, kind: output, shape index: {0}]
  %s7 = inlined_call_operand.hbm [shape: f32[1,8,32], index: 7, kind: output, shape index: {1}]
  %8 = xla_tuple %s6, %s7
  %s9 = sld [smem:[#allocation0]]
  $region42: #{tpu_custom_call.1} parent=0
    _
  %s11 = ssub.s32 1, %s9
  %s12 = scalar_select 0, %s11, %s9
  %13 = sst [smem:[#allocation3]] %s0
  $region1: #{tpu_custom_call.1} parent=0
    #allocation4 [shape = 'u8[4096]{0}', space=vmem, size = 0x1000, scoped, tag = 'output window, operand 1, single buffered']
    #allocation5 [shape = 's32[1]{0}', space=sflag, size = 0x4, scoped, tag = 'scoped memory for tpu_custom_call.1']
    %14 = vsyncpa [#allocation5], 0
    // Predicated region
    $region2: #{tpu_custom_call.1} parent=1 // pred_check
      _
    $region3: #{tpu_custom_call.1} parent=1 // pred_check_branch
      %16 = sbr.rel (0) target = $region5
    $region4: #{tpu_custom_call.1} parent=1 // pred_region
      _
    $region5: #{tpu_custom_call.1} parent=1 // pred_fallthru
      _
    // Predicated region
    $region6: #{tpu_custom_call.1} parent=1 // pred_check
      _
    $region7: #{tpu_custom_call.1} parent=1 // pred_check_branch
      %18 = sbr.rel (0) target = $region9
    $region8: #{tpu_custom_call.1} parent=1 // pred_region
      _
    $region9: #{tpu_custom_call.1} parent=1 // pred_fallthru
      _
    // Predicated region
    $region10: #{tpu_custom_call.1} parent=1 // pred_check
      _
    $region11: #{tpu_custom_call.1} parent=1 // pred_check_branch
      %20 = sbr.rel (0) target = $region13
    $region12: #{tpu_custom_call.1} parent=1 // pred_region
      _
    $region13: #{tpu_custom_call.1} parent=1 // pred_fallthru
      _
    // Predicated region
    $region14: #{tpu_custom_call.1} parent=1 // pred_check
      _
    $region15: #{tpu_custom_call.1} parent=1 // pred_check_branch
      %22 = sbr.rel (0) target = $region17
    $region16: #{tpu_custom_call.1} parent=1 // pred_region
      _
    $region17: #{tpu_custom_call.1} parent=1 // pred_fallthru
      _
    // Predicated region
    $region18: #{tpu_custom_call.1} parent=1 // pred_check
      _
    $region19: #{tpu_custom_call.1} parent=1 // pred_check_branch
      %24 = sbr.rel (0) target = $region21
    $region20: #{tpu_custom_call.1} parent=1 // pred_region
      _
    $region21: #{tpu_custom_call.1} parent=1 // pred_fallthru
      _
    %s26 = sld [smem:[#allocation3]]
    %v27 = vld [vmem:[%s1] sm:$0xf]
    %v28 = vld [vmem:[%s1 + $0x4] sm:$0xf]
    %v29 = vld [vmem:[%s1 + $0x8] sm:$0xf]
    %v30 = vld [vmem:[%s1 + $0xc] sm:$0xf]
    %v31 = vld [vmem:[%s1 + $0x10] sm:$0xf]
    %v32 = vld [vmem:[%s2] sm:$0xf]
    %v33 = vld [vmem:[%s2 + $0x4] sm:$0xf]
    %v34 = vld [vmem:[%s2 + $0x8] sm:$0xf]
    %v35 = vld [vmem:[%s2 + $0xc] sm:$0xf]
    %v36 = vld [vmem:[%s3] sm:$0x1]
    %v38 = vlaneseq
    %v39 = vshrl.u32 %v38, 7
    %v40 = vsub.s32 0, %v39
    %v41 = vrot.slane %v36, %v40
    %v48 = vunpack.c.l.b16 %v27
    %v49 = vunpack.c.l.b16 %v28
    %v50 = vunpack.c.l.b16 %v29
    %v51 = vunpack.c.l.b16 %v30
    %v52 = vunpack.c.l.b16 %v31
    %v53 = vpack.c.b16 %v49, %v48
    %v54 = vpack.c.b16 %v51, %v50
    %v55 = vpack.c.b16 %v52, %v52
    %v60 = vunpack.c.l.b16 %v32
    %v61 = vunpack.c.l.b16 %v33
    %v62 = vunpack.c.l.b16 %v34
    %v63 = vunpack.c.l.b16 %v35
    %v64 = vpack.c.b16 %v61, %v60
    %v65 = vpack.c.b16 %v63, %v62
    %vm68 = vcmask 261120
    %v70 = vsel %vm68, %v53, 0
    %v73 = vsel %vm68, %v54, 0
    %v76 = vsel %vm68, %v55, 0
    %78 = vmatprep.subr.bf16.mxu0 0
    %79 = vmatpush1.bf16.msra.mxu0 0
    %80 = vmatprep.subr.bf16.mxu0 0
    %81 = vmatpush1.bf16.msra.mxu0 0
    %82 = vmatprep.subr.bf16.mxu0 0
    %83 = vmatpush1.bf16.msra.mxu0 0
    %84 = vmatprep.subr.bf16.mxu0 0
    %85 = vmatpush1.bf16.msra.mxu0 0
    %86 = vmatprep.subr.bf16.mxu0 0
    %87 = vmatpush1.bf16.msra.mxu0 0
    %88 = vmatprep.subr.bf16.mxu0 0
    %89 = vmatpush1.bf16.msra.mxu0 0
    %90 = vmatprep.subr.bf16.mxu0 0
    %91 = vmatpush1.bf16.msra.mxu0 %v65
    %92 = vmatprep.subr.bf16.mxu0 0
    %93 = vmatpush1.bf16.msra.mxu0 %v64
    %94 = vmatprep.subr.bf16.mxu0 0
    %95 = vmatpush2.bf16.msra.mxu0 0
    %96 = vmatprep.subr.bf16.mxu0 0
    %97 = vmatpush2.bf16.msra.mxu0 0
    %98 = vmatprep.subr.bf16.mxu0 0
    %99 = vmatpush2.bf16.msra.mxu0 0
    %100 = vmatprep.subr.bf16.mxu0 0
    %101 = vmatpush2.bf16.msra.mxu0 0
    %102 = vmatprep.subr.bf16.mxu0 0
    %103 = vmatpush2.bf16.msra.mxu0 0
    %104 = vmatprep.subr.bf16.mxu0 0
    %105 = vmatpush2.bf16.msra.mxu0 0
    %106 = vmatprep.subr.bf16.mxu0 0
    %107 = vmatpush2.bf16.msra.mxu0 0
    %108 = vmatprep.subr.bf16.mxu0 0
    %109 = vmatpush2.bf16.msra.mxu0 0
    %110 = vmatprep.mubr.bf16.mxu0 0
    %111 = vmatmul.mubr.bf16.gmra.mxu0 %v70
    %v112 = vpop.f32.mrf.mxu0
    %v113 = vadd.f32 %v41, %v112
    %v114 = vpop.f32.mrf.mxu0
    %v115 = vpop.f32.mrf.mxu0
    %v116 = vadd.f32 %v41, %v115
    %v117 = vpop.f32.mrf.mxu0
    %118 = vmatprep.mubr.bf16.mxu0 0
    %119 = vmatmul.mubr.bf16.gmra.mxu0 %v73
    %v120 = vpop.f32.mrf.mxu0
    %v121 = vadd.f32 %v41, %v120
    %v122 = vpop.f32.mrf.mxu0
    %v123 = vpop.f32.mrf.mxu0
    %v124 = vadd.f32 %v41, %v123
    %v125 = vpop.f32.mrf.mxu0
    %126 = vmatprep.mubr.bf16.mxu0 0
    %127 = vmatmul.mubr.bf16.gmra.mxu0 %v76
    %v128 = vpop.f32.mrf.mxu0
    %v129 = vadd.f32 %v41, %v128
    %v130 = vpop.f32.mrf.mxu0
    %v131 = vpop.f32.mrf.mxu0
    %v132 = vpop.f32.mrf.mxu0
    %133 = vdwg.mxu0
    %vm134 = vcmp.gt.f32.partialorder %v113, 0.0
    %vm135 = vcmp.gt.f32.partialorder %v116, 0.0
    %vm136 = vcmp.gt.f32.partialorder %v121, 0.0
    %vm137 = vcmp.gt.f32.partialorder %v124, 0.0
    %vm138 = vcmp.gt.f32.partialorder %v129, 0.0
    %v139 = vmin.f32 %v113, 0.0
    %v140 = vmin.f32 %v116, 0.0
    %v141 = vmin.f32 %v121, 0.0
    %v142 = vmin.f32 %v124, 0.0
    %v143 = vmin.f32 %v129, 0.0
    %v144 = vmul.f32 %v139, 1.442695
    %v145 = vpow.pop %v144
    %v146 = vmul.f32 %v140, 1.442695
    %v147 = vpow.pop %v146
    %v148 = vmul.f32 %v141, 1.442695
    %v149 = vpow.pop %v148
    %v150 = vmul.f32 %v142, 1.442695
    %v151 = vpow.pop %v150
    %v152 = vmul.f32 %v143, 1.442695
    %v153 = vpow.pop %v152
    %v154 = vsub.f32 %v145, 1.0
    %v155 = vsub.f32 %v147, 1.0
    %v156 = vsub.f32 %v149, 1.0
    %v157 = vsub.f32 %v151, 1.0
    %v158 = vsub.f32 %v153, 1.0
    %v159 = vsel %vm134, %v113, %v154
    %v160 = vsel %vm135, %v116, %v155
    %v161 = vsel %vm136, %v121, %v156
    %v162 = vsel %vm137, %v124, %v157
    %v163 = vsel %vm138, %v129, %v158
    %v164 = vpack.c.bf16 %v160, %v159
    %v165 = vpack.c.bf16 %v162, %v161
    %v166 = vpack.c.bf16 %v163, %v163
    %v167 = vld [vmem:[%s4] sm:$0xf]
    %v168 = vld [vmem:[%s4 + $0x4] sm:$0xf]
    %v169 = vld [vmem:[%s4 + $0x8] sm:$0xf]
    %v170 = vld [vmem:[%s4 + $0xc] sm:$0xf]
    %v171 = vld [vmem:[%s4 + $0x10] sm:$0xf]
    %v172 = vld [vmem:[%s4 + $0x14] sm:$0xf]
    %v173 = vld [vmem:[%s4 + $0x18] sm:$0xf]
    %v174 = vld [vmem:[%s4 + $0x1c] sm:$0xf]
    %v175 = vld [vmem:[%s4 + $0x20] sm:$0xf]
    %v176 = vld [vmem:[%s4 + $0x24] sm:$0xf]
    %v177 = vld [vmem:[%s4 + $0x28] sm:$0xf]
    %v178 = vld [vmem:[%s4 + $0x2c] sm:$0xf]
    %v179 = vld [vmem:[%s4 + $0x30] sm:$0xf]
    %v180 = vld [vmem:[%s4 + $0x34] sm:$0xf]
    %v181 = vld [vmem:[%s4 + $0x38] sm:$0xf]
    %v182 = vld [vmem:[%s4 + $0x3c] sm:$0xf]
    %v183 = vld [vmem:[%s5] sm:$0x1]
    %v185 = vlaneseq
    %v186 = vshrl.u32 %v185, 7
    %v187 = vsub.s32 0, %v186
    %v188 = vrot.slane %v183, %v187
    %v206 = vunpack.c.l.b16 %v167
    %v207 = vunpack.c.l.b16 %v168
    %v208 = vunpack.c.l.b16 %v169
    %v209 = vunpack.c.l.b16 %v170
    %v210 = vunpack.c.l.b16 %v171
    %v211 = vunpack.c.l.b16 %v172
    %v212 = vunpack.c.l.b16 %v173
    %v213 = vunpack.c.l.b16 %v174
    %v214 = vunpack.c.l.b16 %v175
    %v215 = vunpack.c.l.b16 %v176
    %v216 = vunpack.c.l.b16 %v177
    %v217 = vunpack.c.l.b16 %v178
    %v218 = vunpack.c.l.b16 %v179
    %v219 = vunpack.c.l.b16 %v180
    %v220 = vunpack.c.l.b16 %v181
    %v221 = vunpack.c.l.b16 %v182
    %v222 = vpack.c.b16 %v207, %v206
    %v223 = vpack.c.b16 %v209, %v208
    %v224 = vpack.c.b16 %v211, %v210
    %v225 = vpack.c.b16 %v213, %v212
    %v226 = vpack.c.b16 %v215, %v214
    %v227 = vpack.c.b16 %v217, %v216
    %v228 = vpack.c.b16 %v219, %v218
    %v229 = vpack.c.b16 %v221, %v220
    %238 = vmatprep.subr.bf16.mxu0 0
    %239 = vmatpush1.bf16.msra.mxu0 %v229
    %240 = vmatprep.subr.bf16.mxu0 0
    %241 = vmatpush1.bf16.msra.mxu0 %v228
    %242 = vmatprep.subr.bf16.mxu0 0
    %243 = vmatpush1.bf16.msra.mxu0 %v227
    %244 = vmatprep.subr.bf16.mxu0 0
    %245 = vmatpush1.bf16.msra.mxu0 %v226
    %246 = vmatprep.subr.bf16.mxu0 0
    %247 = vmatpush1.bf16.msra.mxu0 %v225
    %248 = vmatprep.subr.bf16.mxu0 0
    %249 = vmatpush1.bf16.msra.mxu0 %v224
    %250 = vmatprep.subr.bf16.mxu0 0
    %251 = vmatpush1.bf16.msra.mxu0 %v223
    %252 = vmatprep.subr.bf16.mxu0 0
    %253 = vmatpush1.bf16.msra.mxu0 %v222
    %254 = vmatprep.subr.bf16.mxu0 0
    %255 = vmatpush2.bf16.msra.mxu0 0
    %256 = vmatprep.subr.bf16.mxu0 0
    %257 = vmatpush2.bf16.msra.mxu0 0
    %258 = vmatprep.subr.bf16.mxu0 0
    %259 = vmatpush2.bf16.msra.mxu0 0
    %260 = vmatprep.subr.bf16.mxu0 0
    %261 = vmatpush2.bf16.msra.mxu0 0
    %262 = vmatprep.subr.bf16.mxu0 0
    %263 = vmatpush2.bf16.msra.mxu0 0
    %264 = vmatprep.subr.bf16.mxu0 0
    %265 = vmatpush2.bf16.msra.mxu0 0
    %266 = vmatprep.subr.bf16.mxu0 0
    %267 = vmatpush2.bf16.msra.mxu0 0
    %268 = vmatprep.subr.bf16.mxu0 0
    %269 = vmatpush2.bf16.msra.mxu0 0
    %270 = vmatprep.mubr.bf16.mxu0 0
    %271 = vmatmul.mubr.bf16.gmra.mxu0 %v164
    %v272 = vpop.f32.mrf.mxu0
    %v273 = vadd.f32 %v188, %v272
    %v274 = vpop.f32.mrf.mxu0
    %v275 = vpop.f32.mrf.mxu0
    %v276 = vadd.f32 %v188, %v275
    %v277 = vpop.f32.mrf.mxu0
    %278 = vmatprep.mubr.bf16.mxu0 0
    %279 = vmatmul.mubr.bf16.gmra.mxu0 %v165
    %v280 = vpop.f32.mrf.mxu0
    %v281 = vadd.f32 %v188, %v280
    %v282 = vpop.f32.mrf.mxu0
    %v283 = vpop.f32.mrf.mxu0
    %v284 = vadd.f32 %v188, %v283
    %v285 = vpop.f32.mrf.mxu0
    %286 = vmatprep.mubr.bf16.mxu0 0
    %287 = vmatmul.mubr.bf16.gmra.mxu0 %v166
    %v288 = vpop.f32.mrf.mxu0
    %v289 = vadd.f32 %v188, %v288
    %v290 = vpop.f32.mrf.mxu0
    %v291 = vpop.f32.mrf.mxu0
    %v292 = vpop.f32.mrf.mxu0
    %293 = vdwg.mxu0
    %vm294 = vcmp.gt.f32.partialorder %v273, 0.0
    %vm295 = vcmp.gt.f32.partialorder %v276, 0.0
    %vm296 = vcmp.gt.f32.partialorder %v281, 0.0
    %vm297 = vcmp.gt.f32.partialorder %v284, 0.0
    %vm298 = vcmp.gt.f32.partialorder %v289, 0.0
    %v299 = vmin.f32 %v273, 0.0
    %v300 = vmin.f32 %v276, 0.0
    %v301 = vmin.f32 %v281, 0.0
    %v302 = vmin.f32 %v284, 0.0
    %v303 = vmin.f32 %v289, 0.0
    %v304 = vmul.f32 %v299, 1.442695
    %v305 = vpow.pop %v304
    %v306 = vmul.f32 %v300, 1.442695
    %v307 = vpow.pop %v306
    %v308 = vmul.f32 %v301, 1.442695
    %v309 = vpow.pop %v308
    %v310 = vmul.f32 %v302, 1.442695
    %v311 = vpow.pop %v310
    %v312 = vmul.f32 %v303, 1.442695
    %v313 = vpow.pop %v312
    %v314 = vsub.f32 %v305, 1.0
    %v315 = vsub.f32 %v307, 1.0
    %v316 = vsub.f32 %v309, 1.0
    %v317 = vsub.f32 %v311, 1.0
    %v318 = vsub.f32 %v313, 1.0
    %v319 = vsel %vm294, %v273, %v314
    %v320 = vsel %vm295, %v276, %v315
    %v321 = vsel %vm296, %v281, %v316
    %v322 = vsel %vm297, %v284, %v317
    %v323 = vsel %vm298, %v289, %v318
    %324 = vst.msk [vmem:[%s6] sm:$0xff] %vm68, %v319
    %325 = vst.msk [vmem:[%s6 + $0x8] sm:$0xff] %vm68, %v320
    %326 = vst.msk [vmem:[%s6 + $0x10] sm:$0xff] %vm68, %v321
    %327 = vst.msk [vmem:[%s6 + $0x18] sm:$0xff] %vm68, %v322
    %328 = vst.msk [vmem:[%s6 + $0x20] sm:$0xff] %vm68, %v323
    %v329 = vsel %vm68, %v319, 0.0
    %v330 = vsel %vm68, %v320, 0.0
    %v331 = vadd.f32 %v329, %v330
    %v332 = vsel %vm68, %v321, 0.0
    %v333 = vadd.f32 %v331, %v332
    %v334 = vsel %vm68, %v322, 0.0
    %v335 = vadd.f32 %v333, %v334
    %v336 = vsel %vm68, %v323, 0.0
    %v337 = vadd.f32 %v335, %v336
    %v338 = vrot.slane %v337, 4
    %v339 = vadd.f32 %v337, %v338
    %v340 = vrot.slane %v339, 2
    %v341 = vadd.f32 %v339, %v340
    %v342 = vrot.slane %v341, 1
    %v343 = vadd.f32 %v341, %v342
    %v344 = vmul.f32 %v319, %v319
    %v345 = vmul.f32 %v320, %v320
    %v346 = vmul.f32 %v321, %v321
    %v347 = vmul.f32 %v322, %v322
    %v348 = vmul.f32 %v323, %v323
    %v349 = vsel %vm68, %v344, 0.0
    %v350 = vsel %vm68, %v345, 0.0
    %v351 = vadd.f32 %v349, %v350
    %v352 = vsel %vm68, %v346, 0.0
    %v353 = vadd.f32 %v351, %v352
    %v354 = vsel %vm68, %v347, 0.0
    %v355 = vadd.f32 %v353, %v354
    %v356 = vsel %vm68, %v348, 0.0
    %v357 = vadd.f32 %v355, %v356
    %v358 = vrot.slane %v357, 4
    %v359 = vadd.f32 %v357, %v358
    %v360 = vrot.slane %v359, 2
    %v361 = vadd.f32 %v359, %v360
    %v362 = vrot.slane %v361, 1
    %v363 = vadd.f32 %v361, %v362
    %vm364 = vcmask 1040384
    %v365 = vsel %vm364, %v343, %v363
    %vm366 = vcmask 1041408
    %v367 = vsel %vm366, %v365, 0.0
    %368 = vst.msk [vmem:[#allocation4] sm:$0xff] %vm68, %v367
    %s369 = sadd.s32 0, 1
    %s370 = smul.u32 %s369, 40
    %p371 = scmp.gt.s32.totalorder %s370, %s26
    // Predicated region
    $region22: #{tpu_custom_call.1} parent=1 // pred_check
      %p372 = pneg %p371
    $region23: #{tpu_custom_call.1} parent=1 // pred_check_branch
      %374 = sbr.rel (%p372) target = $region25
    $region24: #{tpu_custom_call.1} parent=1 // pred_region
      %v375 = vlaneseq
      %v376 = vshrl.u32 %v375, 7
      %v377 = vadd.s32 %v376, 8
      %v378 = vadd.s32 %v376, 16
      %v379 = vadd.s32 %v376, 24
      %v380 = vadd.s32 %v376, 32
      %s381 = smul.u32 0, 40
      %v382 = vstv %s381
      %v383 = vadd.s32 %v376, %v382
      %v384 = vadd.s32 %v377, %v382
      %v385 = vadd.s32 %v378, %v382
      %v386 = vadd.s32 %v379, %v382
      %v387 = vadd.s32 %v380, %v382
      %v388 = vstv %s26
      %vm389 = vcmp.lt.s32.totalorder %v383, %v388
      %vm390 = vcmp.lt.s32.totalorder %v384, %v388
      %vm391 = vcmp.lt.s32.totalorder %v385, %v388
      %vm392 = vcmp.lt.s32.totalorder %v386, %v388
      %vm393 = vcmp.lt.s32.totalorder %v387, %v388
      %v394 = vsel %vm389, 1, 0
      %v395 = vsel %vm390, 1, 0
      %v396 = vsel %vm391, 1, 0
      %v397 = vsel %vm392, 1, 0
      %v398 = vsel %vm393, 1, 0
      %vm399 = vcmp.eq.s32.totalorder %v394, 1
      %vm400 = vcmp.eq.s32.totalorder %v395, 1
      %vm401 = vcmp.eq.s32.totalorder %v396, 1
      %vm402 = vcmp.eq.s32.totalorder %v397, 1
      %vm403 = vcmp.eq.s32.totalorder %v398, 1
      %v404 = vsel %vm399, %v319, 0.0
      %v405 = vsel %vm400, %v320, 0.0
      %v406 = vsel %vm401, %v321, 0.0
      %v407 = vsel %vm402, %v322, 0.0
      %v408 = vsel %vm403, %v323, 0.0
      %v409 = vsel %vm68, %v404, 0.0
      %v410 = vsel %vm68, %v405, 0.0
      %v411 = vadd.f32 %v409, %v410
      %v412 = vsel %vm68, %v406, 0.0
      %v413 = vadd.f32 %v411, %v412
      %v414 = vsel %vm68, %v407, 0.0
      %v415 = vadd.f32 %v413, %v414
      %v416 = vsel %vm68, %v408, 0.0
      %v417 = vadd.f32 %v415, %v416
      %v418 = vrot.slane %v417, 4
      %v419 = vadd.f32 %v417, %v418
      %v420 = vrot.slane %v419, 2
      %v421 = vadd.f32 %v419, %v420
      %v422 = vrot.slane %v421, 1
      %v423 = vadd.f32 %v421, %v422
      %v424 = vmul.f32 %v404, %v319
      %v425 = vmul.f32 %v405, %v320
      %v426 = vmul.f32 %v406, %v321
      %v427 = vmul.f32 %v407, %v322
      %v428 = vmul.f32 %v408, %v323
      %v429 = vsel %vm68, %v424, 0.0
      %v430 = vsel %vm68, %v425, 0.0
      %v431 = vadd.f32 %v429, %v430
      %v432 = vsel %vm68, %v426, 0.0
      %v433 = vadd.f32 %v431, %v432
      %v434 = vsel %vm68, %v427, 0.0
      %v435 = vadd.f32 %v433, %v434
      %v436 = vsel %vm68, %v428, 0.0
      %v437 = vadd.f32 %v435, %v436
      %v438 = vrot.slane %v437, 4
      %v439 = vadd.f32 %v437, %v438
      %v440 = vrot.slane %v439, 2
      %v441 = vadd.f32 %v439, %v440
      %v442 = vrot.slane %v441, 1
      %v443 = vadd.f32 %v441, %v442
      %v444 = vsel %vm364, %v423, %v443
      %v445 = vsel %vm366, %v444, 0.0
      %446 = vst.msk [vmem:[#allocation4] sm:$0xff] %vm68, %v445
    $region25: #{tpu_custom_call.1} parent=1 // pred_fallthru
      _
    // Predicated region
    $region26: #{tpu_custom_call.1} parent=1 // pred_check
      _
    $region27: #{tpu_custom_call.1} parent=1 // pred_check_branch
      %448 = sbr.rel (0) target = $region29
    $region28: #{tpu_custom_call.1} parent=1 // pred_region
      _
    $region29: #{tpu_custom_call.1} parent=1 // pred_fallthru
      _
    // Predicated region
    $region30: #{tpu_custom_call.1} parent=1 // pred_check
      _
    $region31: #{tpu_custom_call.1} parent=1 // pred_check_branch
      %450 = sbr.rel (0) target = $region33
    $region32: #{tpu_custom_call.1} parent=1 // pred_region
      %s452 = ssub.s32 128, 128
      %453 = vsyncadd [#allocation5], %s452
      %s455 = sshll.u32 [#allocation4], 4
      %s456 = int_to_ptr.vmem [resolvable:$true] %s455
      %458 = dma.vmem_to_hbm [thread:$0]  %s456, 128, %s7, [#allocation5]
    $region33: #{tpu_custom_call.1} parent=1 // pred_fallthru
      _
    // Predicated region
    $region34: #{tpu_custom_call.1} parent=1 // pred_check
      _
    $region35: #{tpu_custom_call.1} parent=1 // pred_check_branch
      %460 = sbr.rel (0) target = $region37
    $region36: #{tpu_custom_call.1} parent=1 // pred_region
      _
    $region37: #{tpu_custom_call.1} parent=1 // pred_fallthru
      _
    // Predicated region
    $region38: #{tpu_custom_call.1} parent=1 // pred_check
      _
    $region39: #{tpu_custom_call.1} parent=1 // pred_check_branch
      %462 = sbr.rel (0) target = $region41
    $region40: #{tpu_custom_call.1} parent=1 // pred_region
      %463 = dma.done [#allocation5], 128
    $region41: #{tpu_custom_call.1} parent=1 // pred_fallthru
      _
    %464 = vsyncpa [#allocation5], 1

</llo_original>
